<compile_context>
chip_gen: v7x
topology: tpu7x:2x2x1
jax: 0.10.0
libtpu: 0.0.40
codegen_flags: <defaults>
</compile_context>

<pallas_src>
import functools

import jax
import jax.numpy as jnp
from jax.experimental import pallas as pl
from jax.experimental.pallas import tpu as pltpu


def _round_up(n, m):
    return ((n + m - 1) // m) * m


def _layernorm_kernel(x_ref, gamma_ref, beta_ref, o_ref, *, eps, n_feat):
    # x_ref: (bm, F) tile; gamma_ref / beta_ref: (1, F); o_ref: (bm, F)
    x = x_ref[...].astype(jnp.float32)

    # Single-pass moments: the two reductions are independent -> overlap on XLU.
    s = jnp.sum(x, axis=1, keepdims=True)
    sq = jnp.sum(x * x, axis=1, keepdims=True)
    mean = s * (1.0 / n_feat)
    # Unbiased variance (torch.std default divides by N-1); guard F == 1.
    var = (sq - n_feat * mean * mean) * (1.0 / max(n_feat - 1.0, 1.0))
    var = jnp.maximum(var, 0.0)  # guard tiny negative from cancellation
    std = jnp.sqrt(var)

    denom = std + eps
    inv = pl.reciprocal(denom, approx=True)      # EUP slot, effectively free
    inv = inv * (2.0 - denom * inv)              # one Newton step -> ~exact

    y = (x - mean) * inv
    y = gamma_ref[...].astype(jnp.float32) * y + beta_ref[...].astype(jnp.float32)
    o_ref[...] = y.astype(o_ref.dtype)


def layer_norm(x, gamma, beta, eps=1e-5, block_rows=None,
               vmem_budget_bytes=24 << 20):
    """x: (B, F) array. gamma, beta: (F,). Returns (B, F)."""
    B, F = x.shape
    itemsize = jnp.dtype(x.dtype).itemsize
    # Sublane granularity: 8 for f32, 16 for bf16, 32 for int8.
    sub = {4: 8, 2: 16, 1: 32}.get(itemsize, 8)

    if block_rows is None:
        # ~6 live (bm, F) f32-sized tiles: 2x double-buffered input,
        # 2x double-buffered output, plus compute temporaries.
        bm = vmem_budget_bytes // (6 * F * 4)
        bm = max(sub, (bm // sub) * sub)
        bm = min(bm, 2048)
    else:
        bm = max(sub, _round_up(block_rows, sub))
    bm = min(bm, _round_up(B, sub))

    # Pad batch so the grid divides evenly (padded rows are zeros -> no NaNs,
    # sliced off below).  Decouples tile-size tuning from the batch shape.
    Bp = _round_up(B, bm)
    xp = x if Bp == B else jnp.pad(x, ((0, Bp - B), (0, 0)))

    gamma2 = gamma.reshape(1, F).astype(x.dtype)
    beta2 = beta.reshape(1, F).astype(x.dtype)

    kernel = functools.partial(_layernorm_kernel, eps=float(eps), n_feat=float(F))

    grid = (pl.cdiv(Bp, bm),)
    out = pl.pallas_call(
        kernel,
        out_shape=jax.ShapeDtypeStruct((Bp, F), x.dtype),
        grid_spec=pltpu.PrefetchScalarGridSpec(
            num_scalar_prefetch=0,
            grid=grid,
            in_specs=[
                pl.BlockSpec((bm, F), lambda i: (i, 0)),
                pl.BlockSpec((1, F), lambda i: (0, 0)),
                pl.BlockSpec((1, F), lambda i: (0, 0)),
            ],
            out_specs=pl.BlockSpec((bm, F), lambda i: (i, 0)),
        ),
        compiler_params=pltpu.CompilerParams(
            dimension_semantics=("parallel",),   # shards rows across TCs on v7x
            vmem_limit_bytes=32 << 20,
        ),
        cost_estimate=pl.CostEstimate(
            flops=8 * Bp * F,
            transcendentals=2 * Bp,
            bytes_accessed=2 * Bp * F * itemsize + 2 * F * itemsize,
        ),
    )(xp, gamma2, beta2)

    return out[:B] if Bp != B else out


def layer_norm_ref(x, gamma, beta, eps=1e-5):
    # Pure-JAX reference mirroring the PyTorch forward.
    B = x.shape[0]
    flat = x.reshape(B, -1).astype(jnp.float32)
    mean = flat.mean(axis=1, keepdims=True)
    std = jnp.sqrt(((flat - mean) ** 2).sum(axis=1, keepdims=True)
                   / (flat.shape[1] - 1))
    y = (flat - mean) / (std + eps)
    y = gamma[None, :] * y + beta[None, :]
    return y.reshape(x.shape).astype(x.dtype)


if __name__ == "__main__":
    key = jax.random.PRNGKey(0)

    # Case 1: small shape matching the DDPG fully-connected usage.
    kx, kg, key = jax.random.split(key, 3)
    batch, num_features = 8, 32
    x = jax.random.normal(kx, (batch, num_features), dtype=jnp.float32)
    # gamma ~ Uniform[0,1), beta = zeros (matches module __init__).
    gamma = jax.random.uniform(kg, (num_features,), dtype=jnp.float32)
    beta = jnp.zeros((num_features,), dtype=jnp.float32)

    out = jax.block_until_ready(layer_norm(x, gamma, beta, eps=1e-5))
    ref = layer_norm_ref(x, gamma, beta, eps=1e-5)
    assert jnp.allclose(out, ref, atol=2e-5, rtol=2e-5), "mismatch vs reference (case 1)"

    # Case 2: non-divisible batch + typical DDPG hidden width (exercises the
    # cdiv / padded-tail path and larger tiles).
    kx2, kg2, key = jax.random.split(key, 3)
    batch2, feat2 = 50, 400
    x2 = jax.random.normal(kx2, (batch2, feat2), dtype=jnp.float32)
    gamma2 = jax.random.uniform(kg2, (feat2,), dtype=jnp.float32)
    beta2 = jnp.zeros((feat2,), dtype=jnp.float32)

    out2 = jax.block_until_ready(layer_norm(x2, gamma2, beta2, eps=1e-5))
    ref2 = layer_norm_ref(x2, gamma2, beta2, eps=1e-5)
    assert jnp.allclose(out2, ref2, atol=2e-5, rtol=2e-5), "mismatch vs reference (case 2)"

    print("KERNEL_OK")
</pallas_src>

<mosaic_0001>
module attributes {stable_mosaic.version = 11 : i64} {
  func.func @_layernorm_kernel(%arg0: i32, %arg1: memref<8x32xf32, #tpu.memory_space<vmem>>, %arg2: memref<1x32xf32, #tpu.memory_space<vmem>>, %arg3: memref<1x32xf32, #tpu.memory_space<vmem>>, %arg4: memref<8x32xf32, #tpu.memory_space<vmem>>) attributes {dimension_semantics = [#tpu.dimension_semantics<parallel>], iteration_bounds = array<i64: 1>, scalar_prefetch = 0 : i64, scratch_operands = 0 : i64, tpu.core_type = #tpu.core_type<tc>, window_params = [{transform_indices = @transform_0, window_bounds = array<i64: 8, 32>}, {pipeline_mode = #tpu.pipeline_mode<synchronous>, transform_indices = @transform_1, window_bounds = array<i64: 1, 32>}, {pipeline_mode = #tpu.pipeline_mode<synchronous>, transform_indices = @transform_2, window_bounds = array<i64: 1, 32>}, {transform_indices = @transform_3, window_bounds = array<i64: 8, 32>}]} {
    %c0 = arith.constant 0 : index
    %c0_0 = arith.constant 0 : index
    %0 = vector.load %arg1[%c0, %c0_0] : memref<8x32xf32, #tpu.memory_space<vmem>>, vector<8x32xf32>
    %cst = arith.constant dense<0.000000e+00> : vector<8xf32>
    %1 = vector.multi_reduction <add>, %0, %cst [1] : vector<8x32xf32> to vector<8xf32>
    %2 = vector.shape_cast %1 : vector<8xf32> to vector<8x1xf32>
    %3 = arith.mulf %0, %0 : vector<8x32xf32>
    %cst_1 = arith.constant dense<0.000000e+00> : vector<8xf32>
    %4 = vector.multi_reduction <add>, %3, %cst_1 [1] : vector<8x32xf32> to vector<8xf32>
    %5 = vector.shape_cast %4 : vector<8xf32> to vector<8x1xf32>
    %cst_2 = arith.constant 3.125000e-02 : f32
    %6 = vector.broadcast %cst_2 : f32 to vector<8x1xf32>
    %7 = arith.mulf %2, %6 : vector<8x1xf32>
    %cst_3 = arith.constant 3.200000e+01 : f32
    %8 = vector.broadcast %cst_3 : f32 to vector<8x1xf32>
    %9 = arith.mulf %8, %7 : vector<8x1xf32>
    %10 = arith.mulf %9, %7 : vector<8x1xf32>
    %11 = arith.subf %5, %10 : vector<8x1xf32>
    %cst_4 = arith.constant 0.0322580636 : f32
    %12 = vector.broadcast %cst_4 : f32 to vector<8x1xf32>
    %13 = arith.mulf %11, %12 : vector<8x1xf32>
    %cst_5 = arith.constant 0.000000e+00 : f32
    %14 = vector.broadcast %cst_5 : f32 to vector<8x1xf32>
    %15 = arith.maximumf %13, %14 : vector<8x1xf32>
    %16 = math.sqrt %15 : vector<8x1xf32>
    %cst_6 = arith.constant 9.99999974E-6 : f32
    %17 = vector.broadcast %cst_6 : f32 to vector<8x1xf32>
    %18 = arith.addf %16, %17 : vector<8x1xf32>
    %19 = tpu.reciprocal %18 {approx = true} : vector<8x1xf32> -> vector<8x1xf32>
    %20 = arith.mulf %18, %19 : vector<8x1xf32>
    %cst_7 = arith.constant 2.000000e+00 : f32
    %21 = vector.broadcast %cst_7 : f32 to vector<8x1xf32>
    %22 = arith.subf %21, %20 : vector<8x1xf32>
    %23 = arith.mulf %19, %22 : vector<8x1xf32>
    %24 = vector.broadcast %7 : vector<8x1xf32> to vector<8x32xf32>
    %25 = arith.subf %0, %24 : vector<8x32xf32>
    %26 = vector.broadcast %23 : vector<8x1xf32> to vector<8x32xf32>
    %27 = arith.mulf %25, %26 : vector<8x32xf32>
    %c0_8 = arith.constant 0 : index
    %c0_9 = arith.constant 0 : index
    %28 = vector.load %arg2[%c0_8, %c0_9] : memref<1x32xf32, #tpu.memory_space<vmem>>, vector<1x32xf32>
    %29 = vector.broadcast %28 : vector<1x32xf32> to vector<8x32xf32>
    %30 = arith.mulf %29, %27 : vector<8x32xf32>
    %c0_10 = arith.constant 0 : index
    %c0_11 = arith.constant 0 : index
    %31 = vector.load %arg3[%c0_10, %c0_11] : memref<1x32xf32, #tpu.memory_space<vmem>>, vector<1x32xf32>
    %32 = vector.broadcast %31 : vector<1x32xf32> to vector<8x32xf32>
    %33 = arith.addf %30, %32 : vector<8x32xf32>
    %c0_12 = arith.constant 0 : index
    %c0_13 = arith.constant 0 : index
    %34 = vector.load %arg4[%c0_12, %c0_13] : memref<8x32xf32, #tpu.memory_space<vmem>>, vector<8x32xf32>
    tpu.vector_store %arg4[%c0_12, %c0_13], %33 {strides = array<i32>} : memref<8x32xf32, #tpu.memory_space<vmem>>, vector<8x32xf32>,
    return
  }
  func.func @transform_0(%arg0: i32) -> (i32, i32) {
    %c0_i32 = arith.constant 0 : i32
    %c0_i32_0 = arith.constant 0 : i32
    return %arg0, %c0_i32 : i32, i32
  }
  func.func @transform_1(%arg0: i32) -> (i32, i32) {
    %c0_i32 = arith.constant 0 : i32
    %c0_i32_0 = arith.constant 0 : i32
    %c0_i32_1 = arith.constant 0 : i32
    return %c0_i32, %c0_i32_0 : i32, i32
  }
  func.func @transform_2(%arg0: i32) -> (i32, i32) {
    %c0_i32 = arith.constant 0 : i32
    %c0_i32_0 = arith.constant 0 : i32
    %c0_i32_1 = arith.constant 0 : i32
    return %c0_i32, %c0_i32_0 : i32, i32
  }
  func.func @transform_3(%arg0: i32) -> (i32, i32) {
    %c0_i32 = arith.constant 0 : i32
    %c0_i32_0 = arith.constant 0 : i32
    return %arg0, %c0_i32 : i32, i32
  }
}

</mosaic_0001>

<llo_original>
// kernel: tpu_custom_call.1
$region0: #{tpu_custom_call.1}
  #allocation0 [shape = 'u32[]', space=smem, size = 0x4, offset = 0x4, fixed_abs, tag = 'smem constant byte address 0x4 - core index']
  #allocation1 [shape = 'u32[144,128]{1,0:T(1,128)}', space=vmem, size = 0x12000, scoped, tag = 'internal scratch']
  %s0 = inlined_call_operand.hbm [shape: f32[8,32], index: 0, kind: input, shape index: {}]
  %s1 = inlined_call_operand.vmem [shape: f32[1,32], index: 1, kind: input, shape index: {}]
  %s2 = inlined_call_operand.vmem [shape: f32[1,32], index: 2, kind: input, shape index: {}]
  %s3 = inlined_call_operand.hbm [shape: f32[8,32], index: 3, kind: output, shape index: {}]
  %s4 = sld [smem:[#allocation0]]
  $region26: #{tpu_custom_call.1} parent=0
    _
  %s6 = ssub.s32 1, %s4
  %s7 = scalar_select 0, %s6, %s4
  $region1: #{tpu_custom_call.1} parent=0
    #allocation2 [shape = 'u8[4096]{0}', space=vmem, size = 0x1000, scoped, tag = 'input window, operand 0, single buffered']
    #allocation3 [shape = 's32[1]{0}', space=sflag, size = 0x4, scoped, tag = 'scoped memory for tpu_custom_call.1']
    #allocation4 [shape = 's32[1]{0}', space=sflag, size = 0x4, scoped, tag = 'scoped memory for tpu_custom_call.1']
    #allocation5 [shape = 'u8[4096]{0}', space=vmem, size = 0x1000, scoped, tag = 'output window, operand 0, single buffered']
    %8 = vsyncpa [#allocation3], 0
    %9 = vsyncpa [#allocation4], 0
    // Predicated region
    $region2: #{tpu_custom_call.1} parent=1 // pred_check
      _
    $region3: #{tpu_custom_call.1} parent=1 // pred_check_branch
      %11 = sbr.rel (0) target = $region5
    $region4: #{tpu_custom_call.1} parent=1 // pred_region
      %s13 = ssub.s32 128, 128
      %14 = vsyncadd [#allocation3], %s13
      %s16 = sshll.u32 [#allocation2], 4
      %s17 = int_to_ptr.vmem [resolvable:$true] %s16
      %19 = dma.hbm_to_vmem [thread:$0]  %s0, 128, %s17, [#allocation3]
    $region5: #{tpu_custom_call.1} parent=1 // pred_fallthru
      _
    // Predicated region
    $region6: #{tpu_custom_call.1} parent=1 // pred_check
      _
    $region7: #{tpu_custom_call.1} parent=1 // pred_check_branch
      %21 = sbr.rel (0) target = $region9
    $region8: #{tpu_custom_call.1} parent=1 // pred_region
      _
    $region9: #{tpu_custom_call.1} parent=1 // pred_fallthru
      _
    // Predicated region
    $region10: #{tpu_custom_call.1} parent=1 // pred_check
      _
    $region11: #{tpu_custom_call.1} parent=1 // pred_check_branch
      %23 = sbr.rel (0) target = $region13
    $region12: #{tpu_custom_call.1} parent=1 // pred_region
      _
    $region13: #{tpu_custom_call.1} parent=1 // pred_fallthru
      _
    // Predicated region
    $region14: #{tpu_custom_call.1} parent=1 // pred_check
      _
    $region15: #{tpu_custom_call.1} parent=1 // pred_check_branch
      %25 = sbr.rel (0) target = $region17
    $region16: #{tpu_custom_call.1} parent=1 // pred_region
      %26 = dma.done [#allocation3], 128
    $region17: #{tpu_custom_call.1} parent=1 // pred_fallthru
      _
    %v27 = vld [vmem:[#allocation2] sm:$0xff]
    %vm28 = vcmask 261120
    %v29 = vsel %vm28, %v27, 0.0
    %30 = vadd.xlane.f32.xlu0 %v29
    %v31 = vpop.xlane.xlu0 %30
    %v32 = vmul.f32 %v27, %v27
    %v33 = vsel %vm28, %v32, 0.0
    %34 = vadd.xlane.f32.xlu0 %v33
    %v35 = vpop.xlane.xlu0 %34
    %v36 = vmul.f32 %v31, 0.03125
    %v37 = vmul.f32 %v36, 32.0
    %v38 = vmul.f32 %v37, %v36
    %v39 = vsub.f32 %v35, %v38
    %v40 = vmul.f32 %v39, 0.032258064
    %v41 = vmax.f32 %v40, 0.0
    %v42 = vrsqrt.pop %v41
    %v43 = vmul.f32 %v41, %v42
    %vm44 = vcmp.eq.f32.partialorder %v41, inf
    %v45 = vsel %vm44, %v41, %v43
    %vm46 = vcmp.eq.f32.partialorder %v41, 0.0
    %v47 = vand.u32 %v41, 2147483648
    %v48 = vsel %vm46, %v47, %v45
    %v49 = vadd.f32 %v48, 1e-05
    %v50 = vrcp.pop %v49
    %v51 = vmul.f32 %v49, %v50
    %v52 = vsub.f32 2.0, %v51
    %v53 = vmul.f32 %v50, %v52
    %v54 = vsub.f32 %v27, %v36
    %v55 = vmul.f32 %v54, %v53
    %v56 = vld [vmem:[%s1] sm:$0x1]
    %v58 = vlaneseq
    %v59 = vshrl.u32 %v58, 7
    %v60 = vsub.s32 0, %v59
    %v61 = vrot.slane %v56, %v60
    %v63 = vmul.f32 %v61, %v55
    %v64 = vld [vmem:[%s2] sm:$0x1]
    %v66 = vlaneseq
    %v67 = vshrl.u32 %v66, 7
    %v68 = vsub.s32 0, %v67
    %v69 = vrot.slane %v64, %v68
    %v71 = vadd.f32 %v63, %v69
    %72 = vst.msk [vmem:[#allocation5] sm:$0xff] %vm28, %v71
    // Predicated region
    $region18: #{tpu_custom_call.1} parent=1 // pred_check
      _
    $region19: #{tpu_custom_call.1} parent=1 // pred_check_branch
      %74 = sbr.rel (0) target = $region21
    $region20: #{tpu_custom_call.1} parent=1 // pred_region
      %s76 = ssub.s32 128, 128
      %77 = vsyncadd [#allocation4], %s76
      %s79 = sshll.u32 [#allocation5], 4
      %s80 = int_to_ptr.vmem [resolvable:$true] %s79
      %82 = dma.vmem_to_hbm [thread:$0]  %s80, 128, %s3, [#allocation4]
    $region21: #{tpu_custom_call.1} parent=1 // pred_fallthru
      _
    // Predicated region
    $region22: #{tpu_custom_call.1} parent=1 // pred_check
      _
    $region23: #{tpu_custom_call.1} parent=1 // pred_check_branch
      %84 = sbr.rel (0) target = $region25
    $region24: #{tpu_custom_call.1} parent=1 // pred_region
      %85 = dma.done [#allocation4], 128
    $region25: #{tpu_custom_call.1} parent=1 // pred_fallthru
      _
    %86 = vsyncpa [#allocation3], 1
    %87 = vsyncpa [#allocation4], 1

</llo_original>
